<compile_context>
chip_gen: v7x
topology: tpu7x:2x2x1
jax: 0.10.0
libtpu: 0.0.40
codegen_flags: <defaults>
</compile_context>

<pallas_src>
import jax
import jax.numpy as jnp
from jax.experimental import pallas as pl
from jax.experimental.pallas import tpu as pltpu

LN_EPS = 1e-5


def make_ffn_kernel(n_inputs, total_features):
    """Build a kernel specialized for `n_inputs` concatenated pieces."""
    inv_total = 1.0 / float(total_features)

    def kernel(*refs):
        x_refs = refs[:n_inputs]                      # (row_tile, feat_i) each
        w1_refs = refs[n_inputs:2 * n_inputs]         # (feat_i, hidden) W1' pieces
        b1_ref, w2_ref, b2_ref, out_ref = refs[2 * n_inputs:]

        # LN math in f32 regardless of storage dtype (v5e VPU has no bf16).
        xs = [r[...].astype(jnp.float32) for r in x_refs]

        # One-pass LayerNorm statistics over the (virtual) concatenated feature
        # axis: accumulate sum(x) and sum(x*x) per piece; var = E[x^2] - mean^2.
        s = None
        sq = None
        for x in xs:
            ps = jnp.sum(x, axis=-1, keepdims=True)
            pq = jnp.sum(x * x, axis=-1, keepdims=True)
            s = ps if s is None else s + ps
            sq = pq if sq is None else sq + pq
        mean = s * inv_total
        var = jnp.maximum(sq * inv_total - mean * mean, 0.0)
        inv_std = jax.lax.rsqrt(var + LN_EPS)

        # First linear via split-W1' (gamma/beta already folded into W1'/b1'):
        #   h = sum_i dot(xhat_i, W1'_i) + b1'
        # Activations cast to the weight's native dtype (bf16 fast MXU path)
        # right before the dot; accumulation in f32.
        acc = None
        for x, w_ref in zip(xs, w1_refs):
            w = w_ref[...]
            xhat = (x - mean) * inv_std
            part = jnp.dot(xhat.astype(w.dtype), w,
                           preferred_element_type=jnp.float32)
            acc = part if acc is None else acc + part
        h = jnp.maximum(acc + b1_ref[...], 0.0)

        # Second linear + residual on x[0] (already resident, no second HBM read).
        w2 = w2_ref[...]
        y = jnp.dot(h.astype(w2.dtype), w2,
                    preferred_element_type=jnp.float32) + b2_ref[...]
        out_ref[...] = (y + xs[0]).astype(out_ref.dtype)

    return kernel


def _default_row_tile():
    # v6e (128 MiB VMEM) tolerates bigger row tiles than v7x (64 MiB).
    try:
        vmem = pltpu.get_tpu_info().vmem_capacity_bytes
        return 1024 if vmem >= (100 << 20) else 512
    except Exception:
        return 512


def multi_input_ffn(x_list, gamma, beta, w1, b1, w2, b2, *, row_tile=None):
    """x_list: list of arrays [..., feat_i]; returns array shaped like x_list[0]."""
    if row_tile is None:
        row_tile = _default_row_tile()

    x0 = x_list[0]
    orig_shape = x0.shape
    size = int(orig_shape[-1])
    feat_sizes = [int(x.shape[-1]) for x in x_list]
    total = sum(feat_sizes)
    hidden = int(w1.shape[-1])
    n = len(x_list)

    rows = 1
    for d in orig_shape[:-1]:
        rows *= int(d)

    # Tile selection: big tiles amortize the ~600-cycle per-grid-step overhead,
    # but keep >= 2 grid steps whenever rows > 8 so the "parallel" axis can be
    # sharded across both v7x TensorCores.  The last block may be ragged —
    # Pallas masks OOB rows (rows are independent), so no wrapper-side jnp.pad.
    rt_two_steps = max(8, (((rows + 1) // 2) + 7) // 8 * 8)
    rt = min(row_tile, rt_two_steps)
    num_blocks = pl.cdiv(rows, rt)
    grid = (num_blocks,)

    xs2 = [x.reshape(rows, f) for x, f in zip(x_list, feat_sizes)]

    # Fold the LayerNorm affine into the first linear (done once, in f32);
    # weights then keep their native dtype (no forced f32 up-cast).
    gamma32 = gamma.astype(jnp.float32)
    beta32 = beta.astype(jnp.float32)
    w1_32 = w1.astype(jnp.float32)
    w1_folded = (gamma32[:, None] * w1_32).astype(w1.dtype)
    b1_folded = (b1.astype(jnp.float32) + beta32 @ w1_32).reshape(1, hidden)
    b2_2 = b2.astype(jnp.float32).reshape(1, size)

    w1_pieces = []
    off = 0
    for f in feat_sizes:
        w1_pieces.append(w1_folded[off:off + f, :])
        off += f

    x_specs = [pl.BlockSpec((rt, f), lambda i: (i, 0)) for f in feat_sizes]
    w1_specs = [pl.BlockSpec((f, hidden), lambda i: (0, 0)) for f in feat_sizes]
    # NOTE: grid-invariant weight/bias blocks revisit block (0,0) every step, so
    # they are DMA'd once and stay VMEM-resident; on v7x they could additionally
    # be single-buffered (pipeline_mode=pl.Buffered(1)) to halve their footprint.

    out = pl.pallas_call(
        make_ffn_kernel(n, total),
        out_shape=jax.ShapeDtypeStruct((rows, size), x0.dtype),
        grid_spec=pltpu.PrefetchScalarGridSpec(
            num_scalar_prefetch=0,
            grid=grid,
            in_specs=(
                x_specs + w1_specs + [
                    pl.BlockSpec((1, hidden), lambda i: (0, 0)),      # b1'
                    pl.BlockSpec((hidden, size), lambda i: (0, 0)),   # W2
                    pl.BlockSpec((1, size), lambda i: (0, 0)),        # b2
                ]
            ),
            out_specs=pl.BlockSpec((rt, size), lambda i: (i, 0)),
        ),
        compiler_params=pltpu.CompilerParams(
            dimension_semantics=("parallel",),
            vmem_limit_bytes=32 * 1024 * 1024,
        ),
    )(*xs2, *w1_pieces, b1_folded, w2, b2_2)

    return out.reshape(orig_shape)


def reference_ffn(x_list, gamma, beta, w1, b1, w2, b2):
    xcat = jnp.concatenate(x_list, axis=-1).astype(jnp.float32)
    mean = jnp.mean(xcat, axis=-1, keepdims=True)
    var = jnp.mean((xcat - mean) ** 2, axis=-1, keepdims=True)
    xn = (xcat - mean) / jnp.sqrt(var + LN_EPS) * gamma + beta
    h = jnp.maximum(xn @ w1.astype(jnp.float32) + b1, 0.0)
    y = h @ w2.astype(jnp.float32) + b2
    return y + x_list[0]


if __name__ == "__main__":
    # Module config: size=32, hidden_size=64, inp_sizes=[16] -> total_input_size=48
    size, hidden, inp = 32, 64, 16
    total = size + inp
    batch, seq = 2, 8

    key = jax.random.PRNGKey(0)
    k0, k1, kw1, kb1, kw2, kb2, kg, kbt = jax.random.split(key, 8)

    # Inputs (two tensors concatenated along the last dim, as in forward(*x)).
    x0 = jax.random.normal(k0, (batch, seq, size), dtype=jnp.float32)
    x1 = jax.random.normal(k1, (batch, seq, inp), dtype=jnp.float32)

    # Deterministic synthetic parameters (shapes match nn.Linear / nn.LayerNorm).
    w1 = jax.random.normal(kw1, (total, hidden), dtype=jnp.float32) * 0.05
    b1 = jax.random.normal(kb1, (hidden,), dtype=jnp.float32) * 0.01
    w2 = jax.random.normal(kw2, (hidden, size), dtype=jnp.float32) * 0.05
    b2 = jax.random.normal(kb2, (size,), dtype=jnp.float32) * 0.01
    gamma = 1.0 + 0.1 * jax.random.normal(kg, (total,), dtype=jnp.float32)
    beta = 0.1 * jax.random.normal(kbt, (total,), dtype=jnp.float32)

    out = jax.block_until_ready(
        multi_input_ffn([x0, x1], gamma, beta, w1, b1, w2, b2))
    ref = reference_ffn([x0, x1], gamma, beta, w1, b1, w2, b2)
    assert out.shape == x0.shape
    assert jnp.allclose(out, ref, atol=1e-4, rtol=1e-4), "mismatch vs reference"

    # Ragged row count (rows % row_tile != 0): exercises the masked-tail path
    # (no wrapper-side padding / slicing anymore).
    x0b = jax.random.normal(k0, (3, 7, size), dtype=jnp.float32)
    x1b = jax.random.normal(k1, (3, 7, inp), dtype=jnp.float32)
    out_b = jax.block_until_ready(
        multi_input_ffn([x0b, x1b], gamma, beta, w1, b1, w2, b2))
    ref_b = reference_ffn([x0b, x1b], gamma, beta, w1, b1, w2, b2)
    assert jnp.allclose(out_b, ref_b, atol=1e-4, rtol=1e-4), "mismatch (ragged rows)"

    # bf16 weights: native-dtype MXU path (activations cast to bf16 only at the
    # dots; LN math and accumulation stay f32).
    out_bf16 = jax.block_until_ready(
        multi_input_ffn([x0, x1], gamma, beta,
                        w1.astype(jnp.bfloat16), b1,
                        w2.astype(jnp.bfloat16), b2))
    assert jnp.allclose(out_bf16, ref, atol=5e-2, rtol=5e-2), "mismatch (bf16 path)"

    print("KERNEL_OK")
</pallas_src>

<mosaic_0001>
module attributes {stable_mosaic.version = 11 : i64} {
  func.func @kernel(%arg0: i32, %arg1: memref<8x32xf32, #tpu.memory_space<vmem>>, %arg2: memref<8x16xf32, #tpu.memory_space<vmem>>, %arg3: memref<32x64xf32, #tpu.memory_space<vmem>>, %arg4: memref<16x64xf32, #tpu.memory_space<vmem>>, %arg5: memref<1x64xf32, #tpu.memory_space<vmem>>, %arg6: memref<64x32xf32, #tpu.memory_space<vmem>>, %arg7: memref<1x32xf32, #tpu.memory_space<vmem>>, %arg8: memref<8x32xf32, #tpu.memory_space<vmem>>) attributes {dimension_semantics = [#tpu.dimension_semantics<parallel>], iteration_bounds = array<i64: 2>, scalar_prefetch = 0 : i64, scratch_operands = 0 : i64, tpu.core_type = #tpu.core_type<tc>, window_params = [{transform_indices = @transform_0, window_bounds = array<i64: 8, 32>}, {transform_indices = @transform_1, window_bounds = array<i64: 8, 16>}, {pipeline_mode = #tpu.pipeline_mode<synchronous>, transform_indices = @transform_2, window_bounds = array<i64: 32, 64>}, {pipeline_mode = #tpu.pipeline_mode<synchronous>, transform_indices = @transform_3, window_bounds = array<i64: 16, 64>}, {pipeline_mode = #tpu.pipeline_mode<synchronous>, transform_indices = @transform_4, window_bounds = array<i64: 1, 64>}, {pipeline_mode = #tpu.pipeline_mode<synchronous>, transform_indices = @transform_5, window_bounds = array<i64: 64, 32>}, {pipeline_mode = #tpu.pipeline_mode<synchronous>, transform_indices = @transform_6, window_bounds = array<i64: 1, 32>}, {transform_indices = @transform_7, window_bounds = array<i64: 8, 32>}]} {
    %c0 = arith.constant 0 : index
    %c0_0 = arith.constant 0 : index
    %0 = vector.load %arg1[%c0, %c0_0] : memref<8x32xf32, #tpu.memory_space<vmem>>, vector<8x32xf32>
    %c0_1 = arith.constant 0 : index
    %c0_2 = arith.constant 0 : index
    %1 = vector.load %arg2[%c0_1, %c0_2] : memref<8x16xf32, #tpu.memory_space<vmem>>, vector<8x16xf32>
    %cst = arith.constant dense<0.000000e+00> : vector<8xf32>
    %2 = vector.multi_reduction <add>, %0, %cst [1] : vector<8x32xf32> to vector<8xf32>
    %3 = vector.shape_cast %2 : vector<8xf32> to vector<8x1xf32>
    %4 = arith.mulf %0, %0 : vector<8x32xf32>
    %cst_3 = arith.constant dense<0.000000e+00> : vector<8xf32>
    %5 = vector.multi_reduction <add>, %4, %cst_3 [1] : vector<8x32xf32> to vector<8xf32>
    %6 = vector.shape_cast %5 : vector<8xf32> to vector<8x1xf32>
    %cst_4 = arith.constant dense<0.000000e+00> : vector<8xf32>
    %7 = vector.multi_reduction <add>, %1, %cst_4 [1] : vector<8x16xf32> to vector<8xf32>
    %8 = vector.shape_cast %7 : vector<8xf32> to vector<8x1xf32>
    %9 = arith.mulf %1, %1 : vector<8x16xf32>
    %cst_5 = arith.constant dense<0.000000e+00> : vector<8xf32>
    %10 = vector.multi_reduction <add>, %9, %cst_5 [1] : vector<8x16xf32> to vector<8xf32>
    %11 = vector.shape_cast %10 : vector<8xf32> to vector<8x1xf32>
    %12 = arith.addf %3, %8 : vector<8x1xf32>
    %13 = arith.addf %6, %11 : vector<8x1xf32>
    %cst_6 = arith.constant 0.020833334 : f32
    %14 = vector.broadcast %cst_6 : f32 to vector<8x1xf32>
    %15 = arith.mulf %12, %14 : vector<8x1xf32>
    %cst_7 = arith.constant 0.020833334 : f32
    %16 = vector.broadcast %cst_7 : f32 to vector<8x1xf32>
    %17 = arith.mulf %13, %16 : vector<8x1xf32>
    %18 = arith.mulf %15, %15 : vector<8x1xf32>
    %19 = arith.subf %17, %18 : vector<8x1xf32>
    %cst_8 = arith.constant 0.000000e+00 : f32
    %20 = vector.broadcast %cst_8 : f32 to vector<8x1xf32>
    %21 = arith.maximumf %19, %20 : vector<8x1xf32>
    %cst_9 = arith.constant 9.99999974E-6 : f32
    %22 = vector.broadcast %cst_9 : f32 to vector<8x1xf32>
    %23 = arith.addf %21, %22 : vector<8x1xf32>
    %24 = math.rsqrt %23 : vector<8x1xf32>
    %c0_10 = arith.constant 0 : index
    %c0_11 = arith.constant 0 : index
    %25 = vector.load %arg3[%c0_10, %c0_11] : memref<32x64xf32, #tpu.memory_space<vmem>>, vector<32x64xf32>
    %26 = vector.broadcast %15 : vector<8x1xf32> to vector<8x32xf32>
    %27 = arith.subf %0, %26 : vector<8x32xf32>
    %28 = vector.broadcast %24 : vector<8x1xf32> to vector<8x32xf32>
    %29 = arith.mulf %27, %28 : vector<8x32xf32>
    %cst_12 = arith.constant dense<0.000000e+00> : vector<8x64xf32>
    %30 = tpu.matmul %29, %25, %cst_12 {dimension_numbers = #tpu.dot_dimension_numbers<[1], [0], [0], [1], [0, 0, 1, 1], [], []>} : vector<8x32xf32>, vector<32x64xf32>, vector<8x64xf32> -> vector<8x64xf32>
    %c0_13 = arith.constant 0 : index
    %c0_14 = arith.constant 0 : index
    %31 = vector.load %arg4[%c0_13, %c0_14] : memref<16x64xf32, #tpu.memory_space<vmem>>, vector<16x64xf32>
    %32 = vector.broadcast %15 : vector<8x1xf32> to vector<8x16xf32>
    %33 = arith.subf %1, %32 : vector<8x16xf32>
    %34 = vector.broadcast %24 : vector<8x1xf32> to vector<8x16xf32>
    %35 = arith.mulf %33, %34 : vector<8x16xf32>
    %cst_15 = arith.constant dense<0.000000e+00> : vector<8x64xf32>
    %36 = tpu.matmul %35, %31, %cst_15 {dimension_numbers = #tpu.dot_dimension_numbers<[1], [0], [0], [1], [0, 0, 1, 1], [], []>} : vector<8x16xf32>, vector<16x64xf32>, vector<8x64xf32> -> vector<8x64xf32>
    %37 = arith.addf %30, %36 : vector<8x64xf32>
    %c0_16 = arith.constant 0 : index
    %c0_17 = arith.constant 0 : index
    %38 = vector.load %arg5[%c0_16, %c0_17] : memref<1x64xf32, #tpu.memory_space<vmem>>, vector<1x64xf32>
    %39 = vector.broadcast %38 : vector<1x64xf32> to vector<8x64xf32>
    %40 = arith.addf %37, %39 : vector<8x64xf32>
    %cst_18 = arith.constant 0.000000e+00 : f32
    %41 = vector.broadcast %cst_18 : f32 to vector<8x64xf32>
    %42 = arith.maximumf %40, %41 : vector<8x64xf32>
    %c0_19 = arith.constant 0 : index
    %c0_20 = arith.constant 0 : index
    %43 = vector.load %arg6[%c0_19, %c0_20] : memref<64x32xf32, #tpu.memory_space<vmem>>, vector<64x32xf32>
    %cst_21 = arith.constant dense<0.000000e+00> : vector<8x32xf32>
    %44 = tpu.matmul %42, %43, %cst_21 {dimension_numbers = #tpu.dot_dimension_numbers<[1], [0], [0], [1], [0, 0, 1, 1], [], []>} : vector<8x64xf32>, vector<64x32xf32>, vector<8x32xf32> -> vector<8x32xf32>
    %c0_22 = arith.constant 0 : index
    %c0_23 = arith.constant 0 : index
    %45 = vector.load %arg7[%c0_22, %c0_23] : memref<1x32xf32, #tpu.memory_space<vmem>>, vector<1x32xf32>
    %46 = vector.broadcast %45 : vector<1x32xf32> to vector<8x32xf32>
    %47 = arith.addf %44, %46 : vector<8x32xf32>
    %48 = arith.addf %47, %0 : vector<8x32xf32>
    %c0_24 = arith.constant 0 : index
    %c0_25 = arith.constant 0 : index
    %49 = vector.load %arg8[%c0_24, %c0_25] : memref<8x32xf32, #tpu.memory_space<vmem>>, vector<8x32xf32>
    tpu.vector_store %arg8[%c0_24, %c0_25], %48 {strides = array<i32>} : memref<8x32xf32, #tpu.memory_space<vmem>>, vector<8x32xf32>,
    return
  }
  func.func @transform_0(%arg0: i32) -> (i32, i32) {
    %c0_i32 = arith.constant 0 : i32
    %c0_i32_0 = arith.constant 0 : i32
    return %arg0, %c0_i32 : i32, i32
  }
  func.func @transform_1(%arg0: i32) -> (i32, i32) {
    %c0_i32 = arith.constant 0 : i32
    %c0_i32_0 = arith.constant 0 : i32
    return %arg0, %c0_i32 : i32, i32
  }
  func.func @transform_2(%arg0: i32) -> (i32, i32) {
    %c0_i32 = arith.constant 0 : i32
    %c0_i32_0 = arith.constant 0 : i32
    %c0_i32_1 = arith.constant 0 : i32
    return %c0_i32, %c0_i32_0 : i32, i32
  }
  func.func @transform_3(%arg0: i32) -> (i32, i32) {
    %c0_i32 = arith.constant 0 : i32
    %c0_i32_0 = arith.constant 0 : i32
    %c0_i32_1 = arith.constant 0 : i32
    return %c0_i32, %c0_i32_0 : i32, i32
  }
  func.func @transform_4(%arg0: i32) -> (i32, i32) {
    %c0_i32 = arith.constant 0 : i32
    %c0_i32_0 = arith.constant 0 : i32
    %c0_i32_1 = arith.constant 0 : i32
    return %c0_i32, %c0_i32_0 : i32, i32
  }
  func.func @transform_5(%arg0: i32) -> (i32, i32) {
    %c0_i32 = arith.constant 0 : i32
    %c0_i32_0 = arith.constant 0 : i32
    %c0_i32_1 = arith.constant 0 : i32
    return %c0_i32, %c0_i32_0 : i32, i32
  }
  func.func @transform_6(%arg0: i32) -> (i32, i32) {
    %c0_i32 = arith.constant 0 : i32
    %c0_i32_0 = arith.constant 0 : i32
    %c0_i32_1 = arith.constant 0 : i32
    return %c0_i32, %c0_i32_0 : i32, i32
  }
  func.func @transform_7(%arg0: i32) -> (i32, i32) {
    %c0_i32 = arith.constant 0 : i32
    %c0_i32_0 = arith.constant 0 : i32
    return %arg0, %c0_i32 : i32, i32
  }
}

</mosaic_0001>

<llo_original>
// kernel: tpu_custom_call.1
$region0: #{tpu_custom_call.1}
  #allocation0 [shape = 'u32[]', space=smem, size = 0x4, offset = 0x4, fixed_abs, tag = 'smem constant byte address 0x4 - core index']
  #allocation1 [shape = 'u32[144,128]{1,0:T(1,128)}', space=vmem, size = 0x12000, scoped, tag = 'internal scratch']
  %s0 = inlined_call_operand.vmem [shape: f32[16,32], index: 0, kind: input, shape index: {}]
  %s1 = inlined_call_operand.vmem [shape: f32[16,16], index: 1, kind: input, shape index: {}]
  %s2 = inlined_call_operand.vmem [shape: f32[32,64], index: 2, kind: input, shape index: {}]
  %s3 = inlined_call_operand.vmem [shape: f32[16,64], index: 3, kind: input, shape index: {}]
  %s4 = inlined_call_operand.vmem [shape: f32[1,64], index: 4, kind: input, shape index: {}]
  %s5 = inlined_call_operand.vmem [shape: f32[64,32], index: 5, kind: input, shape index: {}]
  %s6 = inlined_call_operand.vmem [shape: f32[1,32], index: 6, kind: input, shape index: {}]
  %s7 = inlined_call_operand.hbm [shape: f32[16,32], index: 7, kind: output, shape index: {}]
  %s8 = sld [smem:[#allocation0]]
  $region61: #{tpu_custom_call.1} parent=0
    _
  %s10 = ssub.s32 1, %s8
  %s11 = scalar_select 0, %s10, %s8
  $region1: #{tpu_custom_call.1} parent=0
    #allocation2 [shape = 'u8[8192]{0}', space=vmem, size = 0x2000, scoped, tag = 'output window, operand 0']
    #allocation3 [shape = 's32[2]{0}', space=sflag, size = 0x8, scoped, tag = 'scoped memory for tpu_custom_call.1']
    %12 = vsyncpa [#allocation3], 0
    %s13 = scalar_lea.sflag [#allocation3], 1
    %14 = vsyncpa %s13, 0
    loop: start=0, step=1, limit=4
    $region2: #{tpu_custom_call.1} parent=1 // loop_pre_header
      _
    $region3: #{tpu_custom_call.1} parent=1 // loop_header
      %s16 = sphi 0, %s20
      %p17 = scmp.ge.s32.totalorder %s16, 4
      %s26 = sphi 0, %s28
      %s29 = sphi 0, %s26
      %s30 = sphi 0, %s29
      %s46 = sphi 0, %s30
      %s52 = sphi 0, %s54
      %s55 = sphi 0, %s52
      %s56 = sphi 0, %s55
      %s72 = sphi 0, %s56
      %s76 = sphi 0, %s76
      %s78 = sphi 0, %s76
      %s79 = sphi 0, %s78
      %s93 = sphi 0, %s79
      %s97 = sphi 0, %s97
      %s99 = sphi 0, %s97
      %s100 = sphi 0, %s99
      %s114 = sphi 0, %s100
      %s118 = sphi 0, %s118
      %s120 = sphi 0, %s118
      %s121 = sphi 0, %s120
      %s135 = sphi 0, %s121
      %s139 = sphi 0, %s139
      %s141 = sphi 0, %s139
      %s142 = sphi 0, %s141
      %s156 = sphi 0, %s142
      %s160 = sphi 0, %s160
      %s162 = sphi 0, %s160
      %s163 = sphi 0, %s162
      %s177 = sphi 0, %s163
      %s183 = sphi 0, %s185
      %s186 = sphi 0, %s183
      %s187 = sphi 0, %s186
      %s203 = sphi 0, %s187
    $region4: #{tpu_custom_call.1} parent=1 // loop_header_branch
      %19 = sbr.rel (%p17) target = $region8
    $region5: #{tpu_custom_call.1} parent=1 // loop_body
      %s21 = ssub.s32 %s16, 1
      %s22 = ssub.s32 %s16, 2
      %s23 = sadd.s32 %s16, 1
      %s24 = ssub.s32 %s16, %s23
      %p25 = scmp.eq.s32.totalorder %s24, 0
      %s27 = sadd.s32 %s26, 1
      %s28 = scalar_select %p25, %s26, %s27
      %p31 = pneg %p25
      %p32 = scmp.eq.s32.totalorder %s16, 1
      %p33 = por %p31, %p32
      %p34 = scmp.ne.s32.totalorder %s26, %s29
      %p35 = scmp.eq.s32.totalorder %s16, 0
      %p36 = por %p34, %p35
      %p37 = scmp.ne.s32.totalorder %s26, %s29
      %p38 = scmp.eq.s32.totalorder %s21, 1
      %p39 = por %p37, %p38
      %p40 = scmp.ne.s32.totalorder %s29, %s30
      %p41 = scmp.eq.s32.totalorder %s21, 0
      %p42 = por %p40, %p41
      %p43 = scmp.ne.s32.totalorder %s29, %s30
      %p44 = scmp.eq.s32.totalorder %s22, 1
      %p45 = por %p43, %p44
      %p47 = scmp.ne.s32.totalorder %s30, %s46
      %p48 = scmp.eq.s32.totalorder %s22, 0
      %p49 = por %p47, %p48
      %s50 = ssub.s32 %s16, %s23
      %p51 = scmp.eq.s32.totalorder %s50, 0
      %s53 = sadd.s32 %s52, 1
      %s54 = scalar_select %p51, %s52, %s53
      %p57 = pneg %p51
      %p58 = scmp.eq.s32.totalorder %s16, 1
      %p59 = por %p57, %p58
      %p60 = scmp.ne.s32.totalorder %s52, %s55
      %p61 = scmp.eq.s32.totalorder %s16, 0
      %p62 = por %p60, %p61
      %p63 = scmp.ne.s32.totalorder %s52, %s55
      %p64 = scmp.eq.s32.totalorder %s21, 1
      %p65 = por %p63, %p64
      %p66 = scmp.ne.s32.totalorder %s55, %s56
      %p67 = scmp.eq.s32.totalorder %s21, 0
      %p68 = por %p66, %p67
      %p69 = scmp.ne.s32.totalorder %s55, %s56
      %p70 = scmp.eq.s32.totalorder %s22, 1
      %p71 = por %p69, %p70
      %p73 = scmp.ne.s32.totalorder %s56, %s72
      %p74 = scmp.eq.s32.totalorder %s22, 0
      %p75 = por %p73, %p74
      %s77 = sadd.s32 %s76, 1
      %p80 = scmp.eq.s32.totalorder %s16, 1
      %p81 = scmp.ne.s32.totalorder %s76, %s78
      %p82 = scmp.eq.s32.totalorder %s16, 0
      %p83 = por %p81, %p82
      %p84 = scmp.ne.s32.totalorder %s76, %s78
      %p85 = scmp.eq.s32.totalorder %s21, 1
      %p86 = por %p84, %p85
      %p87 = scmp.ne.s32.totalorder %s78, %s79
      %p88 = scmp.eq.s32.totalorder %s21, 0
      %p89 = por %p87, %p88
      %p90 = scmp.ne.s32.totalorder %s78, %s79
      %p91 = scmp.eq.s32.totalorder %s22, 1
      %p92 = por %p90, %p91
      %p94 = scmp.ne.s32.totalorder %s79, %s93
      %p95 = scmp.eq.s32.totalorder %s22, 0
      %p96 = por %p94, %p95
      %s98 = sadd.s32 %s97, 1
      %p101 = scmp.eq.s32.totalorder %s16, 1
      %p102 = scmp.ne.s32.totalorder %s97, %s99
      %p103 = scmp.eq.s32.totalorder %s16, 0
      %p104 = por %p102, %p103
      %p105 = scmp.ne.s32.totalorder %s97, %s99
      %p106 = scmp.eq.s32.totalorder %s21, 1
      %p107 = por %p105, %p106
      %p108 = scmp.ne.s32.totalorder %s99, %s100
      %p109 = scmp.eq.s32.totalorder %s21, 0
      %p110 = por %p108, %p109
      %p111 = scmp.ne.s32.totalorder %s99, %s100
      %p112 = scmp.eq.s32.totalorder %s22, 1
      %p113 = por %p111, %p112
      %p115 = scmp.ne.s32.totalorder %s100, %s114
      %p116 = scmp.eq.s32.totalorder %s22, 0
      %p117 = por %p115, %p116
      %s119 = sadd.s32 %s118, 1
      %p122 = scmp.eq.s32.totalorder %s16, 1
      %p123 = scmp.ne.s32.totalorder %s118, %s120
      %p124 = scmp.eq.s32.totalorder %s16, 0
      %p125 = por %p123, %p124
      %p126 = scmp.ne.s32.totalorder %s118, %s120
      %p127 = scmp.eq.s32.totalorder %s21, 1
      %p128 = por %p126, %p127
      %p129 = scmp.ne.s32.totalorder %s120, %s121
      %p130 = scmp.eq.s32.totalorder %s21, 0
      %p131 = por %p129, %p130
      %p132 = scmp.ne.s32.totalorder %s120, %s121
      %p133 = scmp.eq.s32.totalorder %s22, 1
      %p134 = por %p132, %p133
      %p136 = scmp.ne.s32.totalorder %s121, %s135
      %p137 = scmp.eq.s32.totalorder %s22, 0
      %p138 = por %p136, %p137
      %s140 = sadd.s32 %s139, 1
      %p143 = scmp.eq.s32.totalorder %s16, 1
      %p144 = scmp.ne.s32.totalorder %s139, %s141
      %p145 = scmp.eq.s32.totalorder %s16, 0
      %p146 = por %p144, %p145
      %p147 = scmp.ne.s32.totalorder %s139, %s141
      %p148 = scmp.eq.s32.totalorder %s21, 1
      %p149 = por %p147, %p148
      %p150 = scmp.ne.s32.totalorder %s141, %s142
      %p151 = scmp.eq.s32.totalorder %s21, 0
      %p152 = por %p150, %p151
      %p153 = scmp.ne.s32.totalorder %s141, %s142
      %p154 = scmp.eq.s32.totalorder %s22, 1
      %p155 = por %p153, %p154
      %p157 = scmp.ne.s32.totalorder %s142, %s156
      %p158 = scmp.eq.s32.totalorder %s22, 0
      %p159 = por %p157, %p158
      %s161 = sadd.s32 %s160, 1
      %p164 = scmp.eq.s32.totalorder %s16, 1
      %p165 = scmp.ne.s32.totalorder %s160, %s162
      %p166 = scmp.eq.s32.totalorder %s16, 0
      %p167 = por %p165, %p166
      %p168 = scmp.ne.s32.totalorder %s160, %s162
      %p169 = scmp.eq.s32.totalorder %s21, 1
      %p170 = por %p168, %p169
      %p171 = scmp.ne.s32.totalorder %s162, %s163
      %p172 = scmp.eq.s32.totalorder %s21, 0
      %p173 = por %p171, %p172
      %p174 = scmp.ne.s32.totalorder %s162, %s163
      %p175 = scmp.eq.s32.totalorder %s22, 1
      %p176 = por %p174, %p175
      %p178 = scmp.ne.s32.totalorder %s163, %s177
      %p179 = scmp.eq.s32.totalorder %s22, 0
      %p180 = por %p178, %p179
      %s181 = ssub.s32 %s16, %s23
      %p182 = scmp.eq.s32.totalorder %s181, 0
      %s184 = sadd.s32 %s183, 1
      %s185 = scalar_select %p182, %s183, %s184
      %p188 = pneg %p182
      %p189 = scmp.eq.s32.totalorder %s16, 1
      %p190 = por %p188, %p189
      %p191 = scmp.ne.s32.totalorder %s183, %s186
      %p192 = scmp.eq.s32.totalorder %s16, 0
      %p193 = por %p191, %p192
      %p194 = scmp.ne.s32.totalorder %s183, %s186
      %p195 = scmp.eq.s32.totalorder %s21, 1
      %p196 = por %p194, %p195
      %p197 = scmp.ne.s32.totalorder %s186, %s187
      %p198 = scmp.eq.s32.totalorder %s21, 0
      %p199 = por %p197, %p198
      %p200 = scmp.ne.s32.totalorder %s186, %s187
      %p201 = scmp.eq.s32.totalorder %s22, 1
      %p202 = por %p200, %p201
      %p204 = scmp.ne.s32.totalorder %s187, %s203
      %p205 = scmp.eq.s32.totalorder %s22, 0
      %p206 = por %p204, %p205
      %p207 = scmp.le.s32.totalorder 1, %s16
      %p208 = scmp.lt.s32.totalorder %s16, 3
      %p209 = pnand %p207, %p208
      %p210 = pneg %p209
      // Predicated region
      $region9: #{tpu_custom_call.1} parent=5 // pred_check
        _
      $region10: #{tpu_custom_call.1} parent=5 // pred_check_branch
        %212 = sbr.rel (%p209) target = $region12
      $region11: #{tpu_custom_call.1} parent=5 // pred_region
        %s213 = ssub.s32 %s16, 1
        // Predicated region
        $region13: #{tpu_custom_call.1} parent=11 // pred_check
          %p214 = pneg %p89
        $region14: #{tpu_custom_call.1} parent=11 // pred_check_branch
          %216 = sbr.rel (%p214) target = $region16
        $region15: #{tpu_custom_call.1} parent=11 // pred_region
          _
        $region16: #{tpu_custom_call.1} parent=11 // pred_fallthru
          _
        // Predicated region
        $region17: #{tpu_custom_call.1} parent=11 // pred_check
          %p217 = pneg %p110
        $region18: #{tpu_custom_call.1} parent=11 // pred_check_branch
          %219 = sbr.rel (%p217) target = $region20
        $region19: #{tpu_custom_call.1} parent=11 // pred_region
          _
        $region20: #{tpu_custom_call.1} parent=11 // pred_fallthru
          _
        // Predicated region
        $region21: #{tpu_custom_call.1} parent=11 // pred_check
          %p220 = pneg %p131
        $region22: #{tpu_custom_call.1} parent=11 // pred_check_branch
          %222 = sbr.rel (%p220) target = $region24
        $region23: #{tpu_custom_call.1} parent=11 // pred_region
          _
        $region24: #{tpu_custom_call.1} parent=11 // pred_fallthru
          _
        // Predicated region
        $region25: #{tpu_custom_call.1} parent=11 // pred_check
          %p223 = pneg %p152
        $region26: #{tpu_custom_call.1} parent=11 // pred_check_branch
          %225 = sbr.rel (%p223) target = $region28
        $region27: #{tpu_custom_call.1} parent=11 // pred_region
          _
        $region28: #{tpu_custom_call.1} parent=11 // pred_fallthru
          _
        // Predicated region
        $region29: #{tpu_custom_call.1} parent=11 // pred_check
          %p226 = pneg %p173
        $region30: #{tpu_custom_call.1} parent=11 // pred_check_branch
          %228 = sbr.rel (%p226) target = $region32
        $region31: #{tpu_custom_call.1} parent=11 // pred_region
          _
        $region32: #{tpu_custom_call.1} parent=11 // pred_fallthru
          _
      $region12: #{tpu_custom_call.1} parent=5 // pred_fallthru
        _
      %p229 = scmp.lt.s32.totalorder %s16, 2
      // Predicated region
      $region33: #{tpu_custom_call.1} parent=5 // pred_check
        %p230 = pneg %p229
      $region34: #{tpu_custom_call.1} parent=5 // pred_check_branch
        %232 = sbr.rel (%p230) target = $region36
      $region35: #{tpu_custom_call.1} parent=5 // pred_region
        // Predicated region
        $region37: #{tpu_custom_call.1} parent=35 // pred_check
          %p233 = pneg %p36
        $region38: #{tpu_custom_call.1} parent=35 // pred_check_branch
          %235 = sbr.rel (%p233) target = $region40
        $region39: #{tpu_custom_call.1} parent=35 // pred_region
          %p236 = scmp.lt.s32.totalorder %s16, 1
          %s237 = scalar_select %p236, %s16, 1
          %s238 = smul.addr %s237, 8
          %s239 = scalar_lea.vmem %s0, %s238
        $region40: #{tpu_custom_call.1} parent=35 // pred_fallthru
          _
        // Predicated region
        $region41: #{tpu_custom_call.1} parent=35 // pred_check
          %p240 = pneg %p62
        $region42: #{tpu_custom_call.1} parent=35 // pred_check_branch
          %242 = sbr.rel (%p240) target = $region44
        $region43: #{tpu_custom_call.1} parent=35 // pred_region
          %p243 = scmp.lt.s32.totalorder %s16, 1
          %s244 = scalar_select %p243, %s16, 1
          %s245 = smul.addr %s244, 8
          %s246 = scalar_lea.vmem %s1, %s245
        $region44: #{tpu_custom_call.1} parent=35 // pred_fallthru
          _
      $region36: #{tpu_custom_call.1} parent=5 // pred_fallthru
        _
      %p247 = scmp.le.s32.totalorder 1, %s16
      %p248 = scmp.lt.s32.totalorder %s16, 3
      %p249 = pnand %p247, %p248
      %p250 = pneg %p249
      // Predicated region
      $region45: #{tpu_custom_call.1} parent=5 // pred_check
        _
      $region46: #{tpu_custom_call.1} parent=5 // pred_check_branch
        %252 = sbr.rel (%p249) target = $region48
      $region47: #{tpu_custom_call.1} parent=5 // pred_region
        %s253 = ssub.s32 %s16, 1
        %p254 = scmp.lt.s32.totalorder %s21, 1
        %s255 = scalar_select %p254, %s21, 1
        %s256 = smul.addr %s255, 8
        %s257 = scalar_lea.vmem %s0, %s256
        %p258 = pneg %p42
        %p259 = pneg %p39
        %p260 = scmp.lt.s32.totalorder %s21, 1
        %s261 = scalar_select %p260, %s21, 1
        %s262 = smul.addr %s261, 8
        %s263 = scalar_lea.vmem %s1, %s262
        %p264 = pneg %p68
        %p265 = pneg %p65
        %p266 = pneg %p89
        %p267 = pneg %p86
        %p268 = pneg %p110
        %p269 = pneg %p107
        %p270 = pneg %p131
        %p271 = pneg %p128
        %p272 = pneg %p152
        %p273 = pneg %p149
        %p274 = pneg %p173
        %p275 = pneg %p170
        %p276 = pneg %p199
        %p277 = pneg %p196
        %s278 = sand.u32 %s186, 1
        %s279 = scalar_lea.sflag [#allocation3], %s278
        %s280 = sand.u32 %s186, 1
        %s281 = smul.addr %s280, 8
        %s282 = scalar_lea.vmem [#allocation2], %s281
        %p283 = scmp.lt.s32.totalorder %s21, 1
        %s284 = scalar_select %p283, %s21, 1
        %s285 = smul.addr %s284, 8
        %s286 = scalar_lea.vmem %s0, %s285
        %p287 = scmp.lt.s32.totalorder %s21, 1
        %s288 = scalar_select %p287, %s21, 1
        %s289 = smul.addr %s288, 8
        %s290 = scalar_lea.vmem %s1, %s289
        %v291 = vld [vmem:[%s286] sm:$0xff]
        %v292 = vld [vmem:[%s290] sm:$0xff]
        %vm293 = vcmask 261120
        %v294 = vsel %vm293, %v291, 0.0
        %295 = vadd.xlane.f32.xlu0 %v294
        %v296 = vpop.xlane.xlu0 %295
        %v297 = vmul.f32 %v291, %v291
        %v298 = vsel %vm293, %v297, 0.0
        %299 = vadd.xlane.f32.xlu0 %v298
        %v300 = vpop.xlane.xlu0 %299
        %vm301 = vcmask 130048
        %v302 = vsel %vm301, %v292, 0.0
        %303 = vadd.xlane.f32.xlu0 %v302
        %v304 = vpop.xlane.xlu0 %303
        %v305 = vmul.f32 %v292, %v292
        %v306 = vsel %vm301, %v305, 0.0
        %307 = vadd.xlane.f32.xlu0 %v306
        %v308 = vpop.xlane.xlu0 %307
        %v309 = vadd.f32 %v296, %v304
        %v310 = vadd.f32 %v300, %v308
        %v311 = vmul.f32 %v309, 0.020833334
        %v312 = vmul.f32 %v310, 0.020833334
        %v313 = vmul.f32 %v311, %v311
        %v314 = vsub.f32 %v312, %v313
        %v315 = vmax.f32 %v314, 0.0
        %v316 = vadd.f32 %v315, 1e-05
        %v317 = vrsqrt.pop %v316
        %v318 = vld [vmem:[%s2] sm:$0xff]
        %v319 = vld [vmem:[%s2 + $0x8] sm:$0xff]
        %v320 = vld [vmem:[%s2 + $0x10] sm:$0xff]
        %v321 = vld [vmem:[%s2 + $0x18] sm:$0xff]
        %v322 = vsub.f32 %v291, %v311
        %v323 = vmul.f32 %v322, %v317
        %v324 = vld [vmem:[%s3] sm:$0xff]
        %v325 = vld [vmem:[%s3 + $0x8] sm:$0xff]
        %v326 = vsub.f32 %v292, %v311
        %v327 = vmul.f32 %v326, %v317
        %v329 = vsel %vm301, %v327, 0
        %331 = vmatprep.subr.mxu0 0.0
        %332 = vmatpush1.msra.mxu0 %v324
        %333 = vmatprep.subr.mxu0 0.0
        %334 = vmatpush1.msra.mxu0 %v325
        %335 = vmatprep.subr.mxu0 0.0
        %336 = vmatpush1.msra.mxu0 0.0
        %337 = vmatprep.subr.mxu0 0.0
        %338 = vmatpush1.msra.mxu0 0.0
        %339 = vmatprep.subr.mxu0 0.0
        %340 = vmatpush1.msra.mxu0 0.0
        %341 = vmatprep.subr.mxu0 0.0
        %342 = vmatpush1.msra.mxu0 0.0
        %343 = vmatprep.subr.mxu0 0.0
        %344 = vmatpush1.msra.mxu0 0.0
        %345 = vmatprep.subr.mxu0 0.0
        %346 = vmatpush1.msra.mxu0 0.0
        %347 = vmatprep.subr.mxu0 0.0
        %348 = vmatpush1.msra.mxu0 0.0
        %349 = vmatprep.subr.mxu0 0.0
        %350 = vmatpush1.msra.mxu0 0.0
        %351 = vmatprep.subr.mxu0 0.0
        %352 = vmatpush1.msra.mxu0 0.0
        %353 = vmatprep.subr.mxu0 0.0
        %354 = vmatpush1.msra.mxu0 0.0
        %355 = vmatprep.subr.mxu0 0.0
        %356 = vmatpush1.msra.mxu0 0.0
        %357 = vmatprep.subr.mxu0 0.0
        %358 = vmatpush1.msra.mxu0 0.0
        %359 = vmatprep.subr.mxu0 0.0
        %360 = vmatpush1.msra.mxu0 0.0
        %361 = vmatprep.subr.mxu0 0.0
        %362 = vmatpush1.msra.mxu0 0.0
        %363 = vmatprep.subr.mxu0 0.0
        %364 = vmatpush1.msra.mxu0 0.0
        %365 = vmatprep.subr.mxu0 0.0
        %366 = vmatpush1.msra.mxu0 0.0
        %367 = vmatprep.subr.mxu0 0.0
        %368 = vmatpush1.msra.mxu0 0.0
        %369 = vmatprep.subr.mxu0 0.0
        %370 = vmatpush1.msra.mxu0 0.0
        %371 = vmatprep.subr.mxu0 0.0
        %372 = vmatpush1.msra.mxu0 0.0
        %373 = vmatprep.subr.mxu0 0.0
        %374 = vmatpush1.msra.mxu0 0.0
        %375 = vmatprep.subr.mxu0 0.0
        %376 = vmatpush1.msra.mxu0 0.0
        %377 = vmatprep.subr.mxu0 0.0
        %378 = vmatpush1.msra.mxu0 0.0
        %379 = vmatprep.subr.mxu0 0.0
        %380 = vmatpush1.msra.mxu0 0.0
        %381 = vmatprep.subr.mxu0 0.0
        %382 = vmatpush1.msra.mxu0 0.0
        %383 = vmatprep.subr.mxu0 0.0
        %384 = vmatpush1.msra.mxu0 0.0
        %385 = vmatprep.subr.mxu0 0.0
        %386 = vmatpush1.msra.mxu0 0.0
        %387 = vmatprep.subr.mxu0 0.0
        %388 = vmatpush1.msra.mxu0 0.0
        %389 = vmatprep.subr.mxu0 0.0
        %390 = vmatpush1.msra.mxu0 0.0
        %391 = vmatprep.subr.mxu0 0.0
        %392 = vmatpush1.msra.mxu0 0.0
        %393 = vmatprep.subr.mxu0 0.0
        %394 = vmatpush1.msra.mxu0 0.0
        %395 = vmatprep.mubr.f32.mxu0 0.0
        %396 = vmatmul.mubr.f32.gmra.mrb[0].mxu0 %v329
        %v397 = vpop.f32.mrb[0].mxu0
        %v398 = vadd.f32 0.0, %v397
        %v399 = vpop.f32.mrb[0].mxu0
        %400 = vdwg.mxu0
        %v402 = vsel %vm293, %v323, 0
        %404 = vmatprep.subr.mxu0 0.0
        %405 = vmatpush1.msra.mxu0 %v318
        %406 = vmatprep.subr.mxu0 0.0
        %407 = vmatpush1.msra.mxu0 %v319
        %408 = vmatprep.subr.mxu0 0.0
        %409 = vmatpush1.msra.mxu0 %v320
        %410 = vmatprep.subr.mxu0 0.0
        %411 = vmatpush1.msra.mxu0 %v321
        %412 = vmatprep.subr.mxu0 0.0
        %413 = vmatpush1.msra.mxu0 0.0
        %414 = vmatprep.subr.mxu0 0.0
        %415 = vmatpush1.msra.mxu0 0.0
        %416 = vmatprep.subr.mxu0 0.0
        %417 = vmatpush1.msra.mxu0 0.0
        %418 = vmatprep.subr.mxu0 0.0
        %419 = vmatpush1.msra.mxu0 0.0
        %420 = vmatprep.subr.mxu0 0.0
        %421 = vmatpush1.msra.mxu0 0.0
        %422 = vmatprep.subr.mxu0 0.0
        %423 = vmatpush1.msra.mxu0 0.0
        %424 = vmatprep.subr.mxu0 0.0
        %425 = vmatpush1.msra.mxu0 0.0
        %426 = vmatprep.subr.mxu0 0.0
        %427 = vmatpush1.msra.mxu0 0.0
        %428 = vmatprep.subr.mxu0 0.0
        %429 = vmatpush1.msra.mxu0 0.0
        %430 = vmatprep.subr.mxu0 0.0
        %431 = vmatpush1.msra.mxu0 0.0
        %432 = vmatprep.subr.mxu0 0.0
        %433 = vmatpush1.msra.mxu0 0.0
        %434 = vmatprep.subr.mxu0 0.0
        %435 = vmatpush1.msra.mxu0 0.0
        %436 = vmatprep.subr.mxu0 0.0
        %437 = vmatpush1.msra.mxu0 0.0
        %438 = vmatprep.subr.mxu0 0.0
        %439 = vmatpush1.msra.mxu0 0.0
        %440 = vmatprep.subr.mxu0 0.0
        %441 = vmatpush1.msra.mxu0 0.0
        %442 = vmatprep.subr.mxu0 0.0
        %443 = vmatpush1.msra.mxu0 0.0
        %444 = vmatprep.subr.mxu0 0.0
        %445 = vmatpush1.msra.mxu0 0.0
        %446 = vmatprep.subr.mxu0 0.0
        %447 = vmatpush1.msra.mxu0 0.0
        %448 = vmatprep.subr.mxu0 0.0
        %449 = vmatpush1.msra.mxu0 0.0
        %450 = vmatprep.subr.mxu0 0.0
        %451 = vmatpush1.msra.mxu0 0.0
        %452 = vmatprep.subr.mxu0 0.0
        %453 = vmatpush1.msra.mxu0 0.0
        %454 = vmatprep.subr.mxu0 0.0
        %455 = vmatpush1.msra.mxu0 0.0
        %456 = vmatprep.subr.mxu0 0.0
        %457 = vmatpush1.msra.mxu0 0.0
        %458 = vmatprep.subr.mxu0 0.0
        %459 = vmatpush1.msra.mxu0 0.0
        %460 = vmatprep.subr.mxu0 0.0
        %461 = vmatpush1.msra.mxu0 0.0
        %462 = vmatprep.subr.mxu0 0.0
        %463 = vmatpush1.msra.mxu0 0.0
        %464 = vmatprep.subr.mxu0 0.0
        %465 = vmatpush1.msra.mxu0 0.0
        %466 = vmatprep.subr.mxu0 0.0
        %467 = vmatpush1.msra.mxu0 0.0
        %468 = vmatprep.mubr.f32.mxu0 0.0
        %469 = vmatmul.mubr.f32.gmra.mrb[0].mxu0 %v402
        %v470 = vpop.f32.mrb[0].mxu0
        %v471 = vadd.f32 %v398, %v470
        %v472 = vpop.f32.mrb[0].mxu0
        %473 = vdwg.mxu0
        %v474 = vld [vmem:[%s4] sm:$0x1]
        %v476 = vlaneseq
        %v477 = vshrl.u32 %v476, 7
        %v478 = vsub.s32 0, %v477
        %v479 = vrot.slane %v474, %v478
        %v481 = vadd.f32 %v471, %v479
        %v482 = vmax.f32 %v481, 0.0
        %v483 = vld [vmem:[%s5] sm:$0xff]
        %v484 = vld [vmem:[%s5 + $0x8] sm:$0xff]
        %v485 = vld [vmem:[%s5 + $0x10] sm:$0xff]
        %v486 = vld [vmem:[%s5 + $0x18] sm:$0xff]
        %v487 = vld [vmem:[%s5 + $0x20] sm:$0xff]
        %v488 = vld [vmem:[%s5 + $0x28] sm:$0xff]
        %v489 = vld [vmem:[%s5 + $0x30] sm:$0xff]
        %v490 = vld [vmem:[%s5 + $0x38] sm:$0xff]
        %v491 = vld [vmem:[%s6] sm:$0x1]
        %v493 = vlaneseq
        %v494 = vshrl.u32 %v493, 7
        %v495 = vsub.s32 0, %v494
        %v496 = vrot.slane %v491, %v495
        %vm498 = vcmask 523264
        %v500 = vsel %vm498, %v482, 0
        %502 = vmatprep.subr.mxu0 0.0
        %503 = vmatpush1.msra.mxu0 %v483
        %504 = vmatprep.subr.mxu0 0.0
        %505 = vmatpush1.msra.mxu0 %v484
        %506 = vmatprep.subr.mxu0 0.0
        %507 = vmatpush1.msra.mxu0 %v485
        %508 = vmatprep.subr.mxu0 0.0
        %509 = vmatpush1.msra.mxu0 %v486
        %510 = vmatprep.subr.mxu0 0.0
        %511 = vmatpush1.msra.mxu0 %v487
        %512 = vmatprep.subr.mxu0 0.0
        %513 = vmatpush1.msra.mxu0 %v488
        %514 = vmatprep.subr.mxu0 0.0
        %515 = vmatpush1.msra.mxu0 %v489
        %516 = vmatprep.subr.mxu0 0.0
        %517 = vmatpush1.msra.mxu0 %v490
        %518 = vmatprep.subr.mxu0 0.0
        %519 = vmatpush1.msra.mxu0 0.0
        %520 = vmatprep.subr.mxu0 0.0
        %521 = vmatpush1.msra.mxu0 0.0
        %522 = vmatprep.subr.mxu0 0.0
        %523 = vmatpush1.msra.mxu0 0.0
        %524 = vmatprep.subr.mxu0 0.0
        %525 = vmatpush1.msra.mxu0 0.0
        %526 = vmatprep.subr.mxu0 0.0
        %527 = vmatpush1.msra.mxu0 0.0
        %528 = vmatprep.subr.mxu0 0.0
        %529 = vmatpush1.msra.mxu0 0.0
        %530 = vmatprep.subr.mxu0 0.0
        %531 = vmatpush1.msra.mxu0 0.0
        %532 = vmatprep.subr.mxu0 0.0
        %533 = vmatpush1.msra.mxu0 0.0
        %534 = vmatprep.subr.mxu0 0.0
        %535 = vmatpush1.msra.mxu0 0.0
        %536 = vmatprep.subr.mxu0 0.0
        %537 = vmatpush1.msra.mxu0 0.0
        %538 = vmatprep.subr.mxu0 0.0
        %539 = vmatpush1.msra.mxu0 0.0
        %540 = vmatprep.subr.mxu0 0.0
        %541 = vmatpush1.msra.mxu0 0.0
        %542 = vmatprep.subr.mxu0 0.0
        %543 = vmatpush1.msra.mxu0 0.0
        %544 = vmatprep.subr.mxu0 0.0
        %545 = vmatpush1.msra.mxu0 0.0
        %546 = vmatprep.subr.mxu0 0.0
        %547 = vmatpush1.msra.mxu0 0.0
        %548 = vmatprep.subr.mxu0 0.0
        %549 = vmatpush1.msra.mxu0 0.0
        %550 = vmatprep.subr.mxu0 0.0
        %551 = vmatpush1.msra.mxu0 0.0
        %552 = vmatprep.subr.mxu0 0.0
        %553 = vmatpush1.msra.mxu0 0.0
        %554 = vmatprep.subr.mxu0 0.0
        %555 = vmatpush1.msra.mxu0 0.0
        %556 = vmatprep.subr.mxu0 0.0
        %557 = vmatpush1.msra.mxu0 0.0
        %558 = vmatprep.subr.mxu0 0.0
        %559 = vmatpush1.msra.mxu0 0.0
        %560 = vmatprep.subr.mxu0 0.0
        %561 = vmatpush1.msra.mxu0 0.0
        %562 = vmatprep.subr.mxu0 0.0
        %563 = vmatpush1.msra.mxu0 0.0
        %564 = vmatprep.subr.mxu0 0.0
        %565 = vmatpush1.msra.mxu0 0.0
        %566 = vmatprep.mubr.f32.mxu0 0.0
        %567 = vmatmul.mubr.f32.gmra.mrb[0].mxu0 %v500
        %v568 = vpop.f32.mrb[0].mxu0
        %v569 = vadd.f32 %v496, %v568
        %v570 = vpop.f32.mrb[0].mxu0
        %571 = vdwg.mxu0
        %v572 = vadd.f32 %v569, %v291
        %573 = vst.msk [vmem:[%s282] sm:$0xff] %vm293, %v572
        %s574 = sand.u32 %s186, 1
        %s575 = scalar_lea.sflag [#allocation3], %s574
        %s576 = sand.u32 %s186, 1
        %s577 = smul.addr %s576, 8
        %s578 = scalar_lea.vmem [#allocation2], %s577
        // Predicated region
        $region49: #{tpu_custom_call.1} parent=47 // pred_check
          %p579 = pneg %p196
        $region50: #{tpu_custom_call.1} parent=47 // pred_check_branch
          %581 = sbr.rel (%p579) target = $region52
        $region51: #{tpu_custom_call.1} parent=47 // pred_region
          %s583 = ssub.s32 128, 128
          %584 = vsyncadd %s575, %s583
          %s585 = smul.addr %s21, 128
          %s586 = scalar_lea.hbm %s7, %s585
          %s588 = sshll.u32 %s578, 4
          %s589 = int_to_ptr.vmem [resolvable:$true] %s588
          %591 = dma.vmem_to_hbm [thread:$0]  %s589, 128, %s586, %s575
        $region52: #{tpu_custom_call.1} parent=47 // pred_fallthru
          _
      $region48: #{tpu_custom_call.1} parent=5 // pred_fallthru
        _
      %p592 = scmp.le.s32.totalorder 2, %s16
      // Predicated region
      $region53: #{tpu_custom_call.1} parent=5 // pred_check
        %p593 = pneg %p592
      $region54: #{tpu_custom_call.1} parent=5 // pred_check_branch
        %595 = sbr.rel (%p593) target = $region56
      $region55: #{tpu_custom_call.1} parent=5 // pred_region
        %s596 = ssub.s32 %s16, 2
        // Predicated region
        $region57: #{tpu_custom_call.1} parent=55 // pred_check
          %p597 = pneg %p202
        $region58: #{tpu_custom_call.1} parent=55 // pred_check_branch
          %599 = sbr.rel (%p597) target = $region60
        $region59: #{tpu_custom_call.1} parent=55 // pred_region
          %s600 = sand.u32 %s187, 1
          %s601 = scalar_lea.sflag [#allocation3], %s600
          %s602 = sand.u32 %s187, 1
          %s603 = smul.addr %s602, 8
          %s604 = scalar_lea.vmem [#allocation2], %s603
          %605 = dma.done %s601, 128
        $region60: #{tpu_custom_call.1} parent=55 // pred_fallthru
          _
      $region56: #{tpu_custom_call.1} parent=5 // pred_fallthru
        _
    $region6: #{tpu_custom_call.1} parent=1 // loop_footer
      %s20 = sadd.s32 1, %s16
    $region7: #{tpu_custom_call.1} parent=1 // loop_footer_branch
      %15 = sbr.rel target = $region3
    $region8: #{tpu_custom_call.1} parent=1 // loop_exit
      _
    %606 = vsyncpa [#allocation3], 1
    %s607 = scalar_lea.sflag [#allocation3], 1
    %608 = vsyncpa %s607, 1

</llo_original>
